<compile_context>
chip_gen: v7x
topology: tpu7x:2x2x1
jax: 0.10.0
libtpu: 0.0.40
codegen_flags: <defaults>
</compile_context>

<pallas_src>
import functools

import jax
import jax.numpy as jnp
from jax.experimental import pallas as pl
from jax.experimental.pallas import tpu as pltpu


def _round_up(n, m):
    return ((n + m - 1) // m) * m


# -----------------------------------------------------------------------------
# Kernels
# -----------------------------------------------------------------------------
def _resident_kernel(*refs, has_mask: bool):
    """1-D grid over batch tiles; W1/b1/W2/b2 fully resident in VMEM."""
    if has_mask:
        x_ref, w1_ref, b1_ref, w2_ref, b2_ref, m_ref, o_ref = refs
    else:
        x_ref, w1_ref, b1_ref, w2_ref, b2_ref, o_ref = refs
        m_ref = None

    # add_block: Linear(D -> H) (+ dropout mask); f32 MXU accumulation.
    h = jnp.dot(x_ref[...], w1_ref[...], preferred_element_type=jnp.float32)
    h = h + b1_ref[...]
    if m_ref is not None:                       # static Python branch
        h = h * m_ref[...].astype(jnp.float32)  # {0,1} mask; 1/(1-p) is in W2

    # classifier: Linear(H -> C); one wide lane-dense output slab per tile.
    out = jnp.dot(h.astype(w2_ref.dtype), w2_ref[...],
                  preferred_element_type=jnp.float32)
    o_ref[...] = (out + b2_ref[...]).astype(o_ref.dtype)


def _class_tiled_kernel(*refs, has_mask: bool):
    """2-D grid (batch tiles x class tiles) fallback for very large class_num.

    h is computed once per batch tile (class tile j == 0) into a VMEM scratch
    and reused for every class tile.  This relies on the class axis being the
    innermost, sequentially executed ("arbitrary") grid dimension -- do not
    reorder the grid or mark the class axis "parallel".
    """
    if has_mask:
        x_ref, w1_ref, b1_ref, w2_ref, b2_ref, m_ref, o_ref, h_ref = refs
    else:
        x_ref, w1_ref, b1_ref, w2_ref, b2_ref, o_ref, h_ref = refs
        m_ref = None

    @pl.when(pl.program_id(1) == 0)
    def _():
        h = jnp.dot(x_ref[...], w1_ref[...],
                    preferred_element_type=jnp.float32)
        h = h + b1_ref[...]
        if m_ref is not None:
            h = h * m_ref[...].astype(jnp.float32)
        h_ref[...] = h.astype(h_ref.dtype)

    out = jnp.dot(h_ref[...], w2_ref[...], preferred_element_type=jnp.float32)
    o_ref[...] = (out + b2_ref[...]).astype(o_ref.dtype)


# -----------------------------------------------------------------------------
# Host wrapper
# -----------------------------------------------------------------------------
def classblock_forward(x, w1, b1, w2, b2, *, drop_rate=0.0, seed=0,
                       tb=None, tn=None, compute_dtype=None,
                       force_class_tiling=False, return_padded=False):
    """x:[B,D], w1:[D,H], b1:[H], w2:[H,C], b2:[C] -> [B,C] (ClassBlock.forward)."""
    B, D = x.shape
    H = w1.shape[1]
    C = w2.shape[1]
    drop_rate = float(drop_rate)
    assert 0.0 <= drop_rate < 1.0, "drop_rate must be in [0, 1)"

    out_dtype = x.dtype
    cdt = jnp.dtype(compute_dtype) if compute_dtype is not None else jnp.dtype(x.dtype)
    cbytes = cdt.itemsize
    obytes = jnp.dtype(out_dtype).itemsize

    # Class axis padded to a lane-dense multiple of 128 (unmasked vst).
    C_pad = _round_up(C, 128)
    has_mask = drop_rate > 0.0

    def pick_tb(streamed_w2):
        if B <= 128:
            return _round_up(B, 8)
        if streamed_w2:
            # Streamed W2: arithmetic intensity ~ 2*tb FLOP/byte, so grow tb.
            if B >= 2048:
                return 512
            return 256 if B >= 512 else 128
        # Resident W2: keep >= 4 batch tiles when possible (v7x megacore).
        return 256 if B >= 1024 else 128

    def footprint(tb_, resident, tn_=None):
        f = 2 * tb_ * D * cbytes                         # x tile (dbl-buffered)
        f += 2 * (D * H * cbytes + H * 4)                # W1 + b1
        if resident:
            f += 2 * (H * C_pad * cbytes + C_pad * 4)    # W2 + b2 resident
            f += 2 * tb_ * C_pad * obytes                # out slab
        else:
            f += 2 * (H * tn_ * cbytes + tn_ * 4)        # W2/b2 class tile
            f += 2 * tb_ * tn_ * obytes                  # out tile
            f += tb_ * H * cbytes                        # h scratch
        if has_mask:
            f += 2 * tb_ * H * cbytes                    # dropout mask tile
        return f

    VMEM_BUDGET = 40 * 1024 * 1024                       # headroom vs v7x 64 MiB
    tb_res = tb if tb is not None else pick_tb(streamed_w2=False)
    resident = (not force_class_tiling) and footprint(tb_res, True) <= VMEM_BUDGET
    if resident:
        tb = tb_res
        tn = C_pad
    else:
        tb = tb if tb is not None else pick_tb(streamed_w2=True)
        if tn is None:
            tn = next(c for c in (1024, 512, 256, 128)
                      if c <= C_pad and C_pad % c == 0)
        assert C_pad % tn == 0
    B_pad = _round_up(B, tb)

    # ---- host-side prep ------------------------------------------------------
    w2f = w2.astype(jnp.float32)
    if has_mask:
        w2f = w2f * (1.0 / (1.0 - drop_rate))            # fold rescale into W2
    xc = x.astype(cdt)
    w1c = w1.astype(cdt)
    w2c = w2f.astype(cdt)
    if B_pad != B:
        xc = jnp.pad(xc, ((0, B_pad - B), (0, 0)))
    if C_pad != C:
        w2c = jnp.pad(w2c, ((0, 0), (0, C_pad - C)))
        b2 = jnp.pad(b2.astype(jnp.float32), (0, C_pad - C))
    b1_2d = b1.astype(jnp.float32).reshape(1, H)
    b2_2d = b2.astype(jnp.float32).reshape(1, C_pad)

    args = [xc, w1c, b1_2d, w2c, b2_2d]
    if has_mask:
        keep = jax.random.bernoulli(jax.random.PRNGKey(seed),
                                    p=1.0 - drop_rate, shape=(B_pad, H))
        args.append(keep.astype(cdt))                    # {0,1} mask

    vmem_limit = int(min(max(1.5 * footprint(tb, resident, tn), 32 * 2**20),
                         48 * 2**20))

    if resident:
        in_specs = [
            pl.BlockSpec((tb, D), lambda i: (i, 0)),          # x tile
            pl.BlockSpec((D, H), lambda i: (0, 0)),           # W1 resident
            pl.BlockSpec((1, H), lambda i: (0, 0)),           # b1
            pl.BlockSpec((H, C_pad), lambda i: (0, 0)),       # W2 resident
            pl.BlockSpec((1, C_pad), lambda i: (0, 0)),       # b2
        ]
        if has_mask:
            in_specs.append(pl.BlockSpec((tb, H), lambda i: (i, 0)))
        grid_spec = pltpu.PrefetchScalarGridSpec(
            num_scalar_prefetch=0,
            grid=(B_pad // tb,),
            in_specs=in_specs,
            out_specs=pl.BlockSpec((tb, C_pad), lambda i: (i, 0)))
        kernel = functools.partial(_resident_kernel, has_mask=has_mask)
        dim_sem = ("parallel",)
    else:
        in_specs = [
            pl.BlockSpec((tb, D), lambda i, j: (i, 0)),       # x tile
            pl.BlockSpec((D, H), lambda i, j: (0, 0)),        # W1 resident
            pl.BlockSpec((1, H), lambda i, j: (0, 0)),        # b1
            pl.BlockSpec((H, tn), lambda i, j: (0, j)),       # W2 class tile
            pl.BlockSpec((1, tn), lambda i, j: (0, j)),       # b2 class tile
        ]
        if has_mask:
            in_specs.append(pl.BlockSpec((tb, H), lambda i, j: (i, 0)))
        grid_spec = pltpu.PrefetchScalarGridSpec(
            num_scalar_prefetch=0,
            grid=(B_pad // tb, C_pad // tn),
            in_specs=in_specs,
            out_specs=pl.BlockSpec((tb, tn), lambda i, j: (i, j)),
            scratch_shapes=[pltpu.VMEM((tb, H), cdt)])        # resident h
        kernel = functools.partial(_class_tiled_kernel, has_mask=has_mask)
        # Class axis must stay innermost + "arbitrary" for the h-scratch reuse.
        dim_sem = ("parallel", "arbitrary")

    out = pl.pallas_call(
        kernel,
        out_shape=jax.ShapeDtypeStruct((B_pad, C_pad), out_dtype),
        grid_spec=grid_spec,
        compiler_params=pltpu.CompilerParams(
            dimension_semantics=dim_sem,
            vmem_limit_bytes=vmem_limit),
    )(*args)

    if return_padded or (B_pad == B and C_pad == C):
        return out
    return out[:B, :C]


def init_classblock_params(key, input_dim, class_num, num_bottleneck=512):
    """Mirror weights_init_kaiming / weights_init_classifier (stored [in, out])."""
    k1, k2 = jax.random.split(key)
    std1 = (2.0 / num_bottleneck) ** 0.5      # kaiming_normal, mode='fan_out'
    w1 = jax.random.normal(k1, (input_dim, num_bottleneck), jnp.float32) * std1
    b1 = jnp.zeros((num_bottleneck,), jnp.float32)
    w2 = jax.random.normal(k2, (num_bottleneck, class_num), jnp.float32) * 0.001
    b2 = jnp.zeros((class_num,), jnp.float32)
    return w1, b1, w2, b2


if __name__ == "__main__":
    # Small shapes consistent with the module: class_num=200 pads to a
    # lane-dense 256; B=256 gives two batch tiles on the 1-D grid.
    B, D, H, C = 256, 64, 128, 200

    key = jax.random.PRNGKey(0)
    kx, kp = jax.random.split(key)
    x = jax.random.normal(kx, (B, D), jnp.float32)
    w1, b1, w2, b2 = init_classblock_params(kp, D, C, num_bottleneck=H)

    # Pure-JAX reference (drop_rate == 0 => dropout is identity).
    ref = (x @ w1 + b1) @ w2 + b2

    # 1) f32, resident-W2 fast path (1-D grid, W2 DMA'd once).
    out = jax.block_until_ready(
        classblock_forward(x, w1, b1, w2, b2, drop_rate=0.0))
    assert out.shape == (B, C)
    assert jnp.allclose(out, ref, atol=2e-4, rtol=2e-2), "f32 mismatch vs ref"

    # 2) bf16 compute path (v5e/v6e bf16-native MXUs), f32 accumulation.
    out_bf = jax.block_until_ready(
        classblock_forward(x, w1, b1, w2, b2, drop_rate=0.0,
                           compute_dtype=jnp.bfloat16))
    assert out_bf.shape == (B, C)
    assert float(jnp.max(jnp.abs(out_bf.astype(jnp.float32) - ref))) < 5e-3

    # 3) class-tiled fallback (used when class_num is too large for a resident
    #    W2); exercised explicitly here.
    out_t = jax.block_until_ready(
        classblock_forward(x, w1, b1, w2, b2, drop_rate=0.0,
                           force_class_tiling=True, tn=128))
    assert out_t.shape == (B, C)
    assert jnp.allclose(out_t, ref, atol=2e-4, rtol=2e-2), "tiled mismatch"

    # 4) dropout path (training semantics; host-generated Bernoulli mask,
    #    rescale 1/(1-p) folded into W2).
    out_dp = jax.block_until_ready(
        classblock_forward(x, w1, b1, w2, b2, drop_rate=0.5, seed=123))
    assert out_dp.shape == (B, C)
    assert bool(jnp.all(jnp.isfinite(out_dp)))
    assert not jnp.allclose(out_dp, ref, atol=1e-3), "dropout had no effect"

    print("KERNEL_OK")
</pallas_src>

<mosaic_0001>
module attributes {stable_mosaic.version = 11 : i64} {
  func.func @_resident_kernel(%arg0: i32, %arg1: memref<128x64xf32, #tpu.memory_space<vmem>>, %arg2: memref<64x128xf32, #tpu.memory_space<vmem>>, %arg3: memref<1x128xf32, #tpu.memory_space<vmem>>, %arg4: memref<128x256xf32, #tpu.memory_space<vmem>>, %arg5: memref<1x256xf32, #tpu.memory_space<vmem>>, %arg6: memref<128x256xf32, #tpu.memory_space<vmem>>) attributes {dimension_semantics = [#tpu.dimension_semantics<parallel>], iteration_bounds = array<i64: 2>, scalar_prefetch = 0 : i64, scratch_operands = 0 : i64, tpu.core_type = #tpu.core_type<tc>, window_params = [{transform_indices = @transform_0, window_bounds = array<i64: 128, 64>}, {pipeline_mode = #tpu.pipeline_mode<synchronous>, transform_indices = @transform_1, window_bounds = array<i64: 64, 128>}, {pipeline_mode = #tpu.pipeline_mode<synchronous>, transform_indices = @transform_2, window_bounds = array<i64: 1, 128>}, {pipeline_mode = #tpu.pipeline_mode<synchronous>, transform_indices = @transform_3, window_bounds = array<i64: 128, 256>}, {pipeline_mode = #tpu.pipeline_mode<synchronous>, transform_indices = @transform_4, window_bounds = array<i64: 1, 256>}, {transform_indices = @transform_5, window_bounds = array<i64: 128, 256>}]} {
    %c0 = arith.constant 0 : index
    %c0_0 = arith.constant 0 : index
    %0 = vector.load %arg1[%c0, %c0_0] : memref<128x64xf32, #tpu.memory_space<vmem>>, vector<128x64xf32>
    %c0_1 = arith.constant 0 : index
    %c0_2 = arith.constant 0 : index
    %1 = vector.load %arg2[%c0_1, %c0_2] : memref<64x128xf32, #tpu.memory_space<vmem>>, vector<64x128xf32>
    %cst = arith.constant dense<0.000000e+00> : vector<128x128xf32>
    %2 = tpu.matmul %0, %1, %cst {dimension_numbers = #tpu.dot_dimension_numbers<[1], [0], [0], [1], [0, 0, 1, 1], [], []>} : vector<128x64xf32>, vector<64x128xf32>, vector<128x128xf32> -> vector<128x128xf32>
    %c0_3 = arith.constant 0 : index
    %c0_4 = arith.constant 0 : index
    %3 = vector.load %arg3[%c0_3, %c0_4] : memref<1x128xf32, #tpu.memory_space<vmem>>, vector<1x128xf32>
    %4 = vector.broadcast %3 : vector<1x128xf32> to vector<128x128xf32>
    %5 = arith.addf %2, %4 : vector<128x128xf32>
    %c0_5 = arith.constant 0 : index
    %c0_6 = arith.constant 0 : index
    %6 = vector.load %arg4[%c0_5, %c0_6] : memref<128x256xf32, #tpu.memory_space<vmem>>, vector<128x256xf32>
    %cst_7 = arith.constant dense<0.000000e+00> : vector<128x256xf32>
    %7 = tpu.matmul %5, %6, %cst_7 {dimension_numbers = #tpu.dot_dimension_numbers<[1], [0], [0], [1], [0, 0, 1, 1], [], []>} : vector<128x128xf32>, vector<128x256xf32>, vector<128x256xf32> -> vector<128x256xf32>
    %c0_8 = arith.constant 0 : index
    %c0_9 = arith.constant 0 : index
    %8 = vector.load %arg5[%c0_8, %c0_9] : memref<1x256xf32, #tpu.memory_space<vmem>>, vector<1x256xf32>
    %9 = vector.broadcast %8 : vector<1x256xf32> to vector<128x256xf32>
    %10 = arith.addf %7, %9 : vector<128x256xf32>
    %c0_10 = arith.constant 0 : index
    %c0_11 = arith.constant 0 : index
    %11 = vector.load %arg6[%c0_10, %c0_11] : memref<128x256xf32, #tpu.memory_space<vmem>>, vector<128x256xf32>
    tpu.vector_store %arg6[%c0_10, %c0_11], %10 {strides = array<i32>} : memref<128x256xf32, #tpu.memory_space<vmem>>, vector<128x256xf32>,
    return
  }
  func.func @transform_0(%arg0: i32) -> (i32, i32) {
    %c0_i32 = arith.constant 0 : i32
    %c0_i32_0 = arith.constant 0 : i32
    return %arg0, %c0_i32 : i32, i32
  }
  func.func @transform_1(%arg0: i32) -> (i32, i32) {
    %c0_i32 = arith.constant 0 : i32
    %c0_i32_0 = arith.constant 0 : i32
    %c0_i32_1 = arith.constant 0 : i32
    return %c0_i32, %c0_i32_0 : i32, i32
  }
  func.func @transform_2(%arg0: i32) -> (i32, i32) {
    %c0_i32 = arith.constant 0 : i32
    %c0_i32_0 = arith.constant 0 : i32
    %c0_i32_1 = arith.constant 0 : i32
    return %c0_i32, %c0_i32_0 : i32, i32
  }
  func.func @transform_3(%arg0: i32) -> (i32, i32) {
    %c0_i32 = arith.constant 0 : i32
    %c0_i32_0 = arith.constant 0 : i32
    %c0_i32_1 = arith.constant 0 : i32
    return %c0_i32, %c0_i32_0 : i32, i32
  }
  func.func @transform_4(%arg0: i32) -> (i32, i32) {
    %c0_i32 = arith.constant 0 : i32
    %c0_i32_0 = arith.constant 0 : i32
    %c0_i32_1 = arith.constant 0 : i32
    return %c0_i32, %c0_i32_0 : i32, i32
  }
  func.func @transform_5(%arg0: i32) -> (i32, i32) {
    %c0_i32 = arith.constant 0 : i32
    %c0_i32_0 = arith.constant 0 : i32
    return %arg0, %c0_i32 : i32, i32
  }
}

</mosaic_0001>

<llo_original>
// kernel: tpu_custom_call.1
$region0: #{tpu_custom_call.1}
  #allocation0 [shape = 'u32[]', space=smem, size = 0x4, offset = 0x4, fixed_abs, tag = 'smem constant byte address 0x4 - core index']
  #allocation1 [shape = 'u32[144,128]{1,0:T(1,128)}', space=vmem, size = 0x12000, scoped, tag = 'internal scratch']
  %s0 = inlined_call_operand.vmem [shape: f32[256,64], index: 0, kind: input, shape index: {}]
  %s1 = inlined_call_operand.vmem [shape: f32[64,128], index: 1, kind: input, shape index: {}]
  %s2 = inlined_call_operand.vmem [shape: f32[1,128], index: 2, kind: input, shape index: {}]
  %s3 = inlined_call_operand.vmem [shape: f32[128,256], index: 3, kind: input, shape index: {}]
  %s4 = inlined_call_operand.vmem [shape: f32[1,256], index: 4, kind: input, shape index: {}]
  %s5 = inlined_call_operand.hbm [shape: f32[256,256], index: 5, kind: output, shape index: {}]
  %s6 = sld [smem:[#allocation0]]
  $region53: #{tpu_custom_call.1} parent=0
    _
  %s8 = ssub.s32 1, %s6
  %s9 = scalar_select 0, %s8, %s6
  $region1: #{tpu_custom_call.1} parent=0
    #allocation2 [shape = 'u8[262144]{0}', space=vmem, size = 0x40000, scoped, tag = 'output window, operand 0']
    #allocation3 [shape = 's32[2]{0}', space=sflag, size = 0x8, scoped, tag = 'scoped memory for tpu_custom_call.1']
    %10 = vsyncpa [#allocation3], 0
    %s11 = scalar_lea.sflag [#allocation3], 1
    %12 = vsyncpa %s11, 0
    loop: start=0, step=1, limit=4
    $region2: #{tpu_custom_call.1} parent=1 // loop_pre_header
      _
    $region3: #{tpu_custom_call.1} parent=1 // loop_header
      %s14 = sphi 0, %s18
      %p15 = scmp.ge.s32.totalorder %s14, 4
      %s24 = sphi 0, %s26
      %s27 = sphi 0, %s24
      %s28 = sphi 0, %s27
      %s44 = sphi 0, %s28
      %s48 = sphi 0, %s48
      %s50 = sphi 0, %s48
      %s51 = sphi 0, %s50
      %s65 = sphi 0, %s51
      %s69 = sphi 0, %s69
      %s71 = sphi 0, %s69
      %s72 = sphi 0, %s71
      %s86 = sphi 0, %s72
      %s90 = sphi 0, %s90
      %s92 = sphi 0, %s90
      %s93 = sphi 0, %s92
      %s107 = sphi 0, %s93
      %s111 = sphi 0, %s111
      %s113 = sphi 0, %s111
      %s114 = sphi 0, %s113
      %s128 = sphi 0, %s114
      %s134 = sphi 0, %s136
      %s137 = sphi 0, %s134
      %s138 = sphi 0, %s137
      %s154 = sphi 0, %s138
    $region4: #{tpu_custom_call.1} parent=1 // loop_header_branch
      %17 = sbr.rel (%p15) target = $region8
    $region5: #{tpu_custom_call.1} parent=1 // loop_body
      %s19 = ssub.s32 %s14, 1
      %s20 = ssub.s32 %s14, 2
      %s21 = sadd.s32 %s14, 1
      %s22 = ssub.s32 %s14, %s21
      %p23 = scmp.eq.s32.totalorder %s22, 0
      %s25 = sadd.s32 %s24, 1
      %s26 = scalar_select %p23, %s24, %s25
      %p29 = pneg %p23
      %p30 = scmp.eq.s32.totalorder %s14, 1
      %p31 = por %p29, %p30
      %p32 = scmp.ne.s32.totalorder %s24, %s27
      %p33 = scmp.eq.s32.totalorder %s14, 0
      %p34 = por %p32, %p33
      %p35 = scmp.ne.s32.totalorder %s24, %s27
      %p36 = scmp.eq.s32.totalorder %s19, 1
      %p37 = por %p35, %p36
      %p38 = scmp.ne.s32.totalorder %s27, %s28
      %p39 = scmp.eq.s32.totalorder %s19, 0
      %p40 = por %p38, %p39
      %p41 = scmp.ne.s32.totalorder %s27, %s28
      %p42 = scmp.eq.s32.totalorder %s20, 1
      %p43 = por %p41, %p42
      %p45 = scmp.ne.s32.totalorder %s28, %s44
      %p46 = scmp.eq.s32.totalorder %s20, 0
      %p47 = por %p45, %p46
      %s49 = sadd.s32 %s48, 1
      %p52 = scmp.eq.s32.totalorder %s14, 1
      %p53 = scmp.ne.s32.totalorder %s48, %s50
      %p54 = scmp.eq.s32.totalorder %s14, 0
      %p55 = por %p53, %p54
      %p56 = scmp.ne.s32.totalorder %s48, %s50
      %p57 = scmp.eq.s32.totalorder %s19, 1
      %p58 = por %p56, %p57
      %p59 = scmp.ne.s32.totalorder %s50, %s51
      %p60 = scmp.eq.s32.totalorder %s19, 0
      %p61 = por %p59, %p60
      %p62 = scmp.ne.s32.totalorder %s50, %s51
      %p63 = scmp.eq.s32.totalorder %s20, 1
      %p64 = por %p62, %p63
      %p66 = scmp.ne.s32.totalorder %s51, %s65
      %p67 = scmp.eq.s32.totalorder %s20, 0
      %p68 = por %p66, %p67
      %s70 = sadd.s32 %s69, 1
      %p73 = scmp.eq.s32.totalorder %s14, 1
      %p74 = scmp.ne.s32.totalorder %s69, %s71
      %p75 = scmp.eq.s32.totalorder %s14, 0
      %p76 = por %p74, %p75
      %p77 = scmp.ne.s32.totalorder %s69, %s71
      %p78 = scmp.eq.s32.totalorder %s19, 1
      %p79 = por %p77, %p78
      %p80 = scmp.ne.s32.totalorder %s71, %s72
      %p81 = scmp.eq.s32.totalorder %s19, 0
      %p82 = por %p80, %p81
      %p83 = scmp.ne.s32.totalorder %s71, %s72
      %p84 = scmp.eq.s32.totalorder %s20, 1
      %p85 = por %p83, %p84
      %p87 = scmp.ne.s32.totalorder %s72, %s86
      %p88 = scmp.eq.s32.totalorder %s20, 0
      %p89 = por %p87, %p88
      %s91 = sadd.s32 %s90, 1
      %p94 = scmp.eq.s32.totalorder %s14, 1
      %p95 = scmp.ne.s32.totalorder %s90, %s92
      %p96 = scmp.eq.s32.totalorder %s14, 0
      %p97 = por %p95, %p96
      %p98 = scmp.ne.s32.totalorder %s90, %s92
      %p99 = scmp.eq.s32.totalorder %s19, 1
      %p100 = por %p98, %p99
      %p101 = scmp.ne.s32.totalorder %s92, %s93
      %p102 = scmp.eq.s32.totalorder %s19, 0
      %p103 = por %p101, %p102
      %p104 = scmp.ne.s32.totalorder %s92, %s93
      %p105 = scmp.eq.s32.totalorder %s20, 1
      %p106 = por %p104, %p105
      %p108 = scmp.ne.s32.totalorder %s93, %s107
      %p109 = scmp.eq.s32.totalorder %s20, 0
      %p110 = por %p108, %p109
      %s112 = sadd.s32 %s111, 1
      %p115 = scmp.eq.s32.totalorder %s14, 1
      %p116 = scmp.ne.s32.totalorder %s111, %s113
      %p117 = scmp.eq.s32.totalorder %s14, 0
      %p118 = por %p116, %p117
      %p119 = scmp.ne.s32.totalorder %s111, %s113
      %p120 = scmp.eq.s32.totalorder %s19, 1
      %p121 = por %p119, %p120
      %p122 = scmp.ne.s32.totalorder %s113, %s114
      %p123 = scmp.eq.s32.totalorder %s19, 0
      %p124 = por %p122, %p123
      %p125 = scmp.ne.s32.totalorder %s113, %s114
      %p126 = scmp.eq.s32.totalorder %s20, 1
      %p127 = por %p125, %p126
      %p129 = scmp.ne.s32.totalorder %s114, %s128
      %p130 = scmp.eq.s32.totalorder %s20, 0
      %p131 = por %p129, %p130
      %s132 = ssub.s32 %s14, %s21
      %p133 = scmp.eq.s32.totalorder %s132, 0
      %s135 = sadd.s32 %s134, 1
      %s136 = scalar_select %p133, %s134, %s135
      %p139 = pneg %p133
      %p140 = scmp.eq.s32.totalorder %s14, 1
      %p141 = por %p139, %p140
      %p142 = scmp.ne.s32.totalorder %s134, %s137
      %p143 = scmp.eq.s32.totalorder %s14, 0
      %p144 = por %p142, %p143
      %p145 = scmp.ne.s32.totalorder %s134, %s137
      %p146 = scmp.eq.s32.totalorder %s19, 1
      %p147 = por %p145, %p146
      %p148 = scmp.ne.s32.totalorder %s137, %s138
      %p149 = scmp.eq.s32.totalorder %s19, 0
      %p150 = por %p148, %p149
      %p151 = scmp.ne.s32.totalorder %s137, %s138
      %p152 = scmp.eq.s32.totalorder %s20, 1
      %p153 = por %p151, %p152
      %p155 = scmp.ne.s32.totalorder %s138, %s154
      %p156 = scmp.eq.s32.totalorder %s20, 0
      %p157 = por %p155, %p156
      %p158 = scmp.le.s32.totalorder 1, %s14
      %p159 = scmp.lt.s32.totalorder %s14, 3
      %p160 = pnand %p158, %p159
      %p161 = pneg %p160
      // Predicated region
      $region9: #{tpu_custom_call.1} parent=5 // pred_check
        _
      $region10: #{tpu_custom_call.1} parent=5 // pred_check_branch
        %163 = sbr.rel (%p160) target = $region12
      $region11: #{tpu_custom_call.1} parent=5 // pred_region
        %s164 = ssub.s32 %s14, 1
        // Predicated region
        $region13: #{tpu_custom_call.1} parent=11 // pred_check
          %p165 = pneg %p61
        $region14: #{tpu_custom_call.1} parent=11 // pred_check_branch
          %167 = sbr.rel (%p165) target = $region16
        $region15: #{tpu_custom_call.1} parent=11 // pred_region
          _
        $region16: #{tpu_custom_call.1} parent=11 // pred_fallthru
          _
        // Predicated region
        $region17: #{tpu_custom_call.1} parent=11 // pred_check
          %p168 = pneg %p82
        $region18: #{tpu_custom_call.1} parent=11 // pred_check_branch
          %170 = sbr.rel (%p168) target = $region20
        $region19: #{tpu_custom_call.1} parent=11 // pred_region
          _
        $region20: #{tpu_custom_call.1} parent=11 // pred_fallthru
          _
        // Predicated region
        $region21: #{tpu_custom_call.1} parent=11 // pred_check
          %p171 = pneg %p103
        $region22: #{tpu_custom_call.1} parent=11 // pred_check_branch
          %173 = sbr.rel (%p171) target = $region24
        $region23: #{tpu_custom_call.1} parent=11 // pred_region
          _
        $region24: #{tpu_custom_call.1} parent=11 // pred_fallthru
          _
        // Predicated region
        $region25: #{tpu_custom_call.1} parent=11 // pred_check
          %p174 = pneg %p124
        $region26: #{tpu_custom_call.1} parent=11 // pred_check_branch
          %176 = sbr.rel (%p174) target = $region28
        $region27: #{tpu_custom_call.1} parent=11 // pred_region
          _
        $region28: #{tpu_custom_call.1} parent=11 // pred_fallthru
          _
      $region12: #{tpu_custom_call.1} parent=5 // pred_fallthru
        _
      %p177 = scmp.lt.s32.totalorder %s14, 2
      // Predicated region
      $region29: #{tpu_custom_call.1} parent=5 // pred_check
        %p178 = pneg %p177
      $region30: #{tpu_custom_call.1} parent=5 // pred_check_branch
        %180 = sbr.rel (%p178) target = $region32
      $region31: #{tpu_custom_call.1} parent=5 // pred_region
        // Predicated region
        $region33: #{tpu_custom_call.1} parent=31 // pred_check
          %p181 = pneg %p34
        $region34: #{tpu_custom_call.1} parent=31 // pred_check_branch
          %183 = sbr.rel (%p181) target = $region36
        $region35: #{tpu_custom_call.1} parent=31 // pred_region
          %s184 = smul.u32 16, %s14
          %p185 = scmp.lt.s32.totalorder %s184, 31
          %s186 = scalar_select %p185, %s184, 31
          %s187 = smul.addr %s186, 8
          %s188 = scalar_lea.vmem %s0, %s187
          %s189 = smul.u32 16, %s14
        $region36: #{tpu_custom_call.1} parent=31 // pred_fallthru
          _
      $region32: #{tpu_custom_call.1} parent=5 // pred_fallthru
        _
      %p190 = scmp.le.s32.totalorder 1, %s14
      %p191 = scmp.lt.s32.totalorder %s14, 3
      %p192 = pnand %p190, %p191
      %p193 = pneg %p192
      // Predicated region
      $region37: #{tpu_custom_call.1} parent=5 // pred_check
        _
      $region38: #{tpu_custom_call.1} parent=5 // pred_check_branch
        %195 = sbr.rel (%p192) target = $region40
      $region39: #{tpu_custom_call.1} parent=5 // pred_region
        %s196 = ssub.s32 %s14, 1
        %s197 = smul.u32 16, %s19
        %p198 = scmp.lt.s32.totalorder %s197, 31
        %s199 = scalar_select %p198, %s197, 31
        %s200 = smul.addr %s199, 8
        %s201 = scalar_lea.vmem %s0, %s200
        %p202 = pneg %p40
        %p203 = pneg %p37
        %p204 = pneg %p61
        %p205 = pneg %p58
        %p206 = pneg %p82
        %p207 = pneg %p79
        %p208 = pneg %p103
        %p209 = pneg %p100
        %p210 = pneg %p124
        %p211 = pneg %p121
        %p212 = pneg %p150
        %p213 = pneg %p147
        %s214 = sand.u32 %s137, 1
        %s215 = scalar_lea.sflag [#allocation3], %s214
        %s216 = sand.u32 %s137, 1
        %s217 = smul.addr %s216, 256
        %s218 = scalar_lea.vmem [#allocation2], %s217
        %s219 = smul.u32 16, %s19
        %p220 = scmp.lt.s32.totalorder %s219, 31
        %s221 = scalar_select %p220, %s219, 31
        %s222 = smul.addr %s221, 8
        %s223 = scalar_lea.vmem %s0, %s222
        %s224 = smul.u32 16, %s19
        %s225 = smul.u32 16, %s19
        %v226 = vld [vmem:[%s223] sm:$0xff]
        %v227 = vld [vmem:[%s223 + $0x8] sm:$0xff]
        %v228 = vld [vmem:[%s223 + $0x10] sm:$0xff]
        %v229 = vld [vmem:[%s223 + $0x18] sm:$0xff]
        %v230 = vld [vmem:[%s223 + $0x20] sm:$0xff]
        %v231 = vld [vmem:[%s223 + $0x28] sm:$0xff]
        %v232 = vld [vmem:[%s223 + $0x30] sm:$0xff]
        %v233 = vld [vmem:[%s223 + $0x38] sm:$0xff]
        %v234 = vld [vmem:[%s223 + $0x40] sm:$0xff]
        %v235 = vld [vmem:[%s223 + $0x48] sm:$0xff]
        %v236 = vld [vmem:[%s223 + $0x50] sm:$0xff]
        %v237 = vld [vmem:[%s223 + $0x58] sm:$0xff]
        %v238 = vld [vmem:[%s223 + $0x60] sm:$0xff]
        %v239 = vld [vmem:[%s223 + $0x68] sm:$0xff]
        %v240 = vld [vmem:[%s223 + $0x70] sm:$0xff]
        %v241 = vld [vmem:[%s223 + $0x78] sm:$0xff]
        %v242 = vld [vmem:[%s1] sm:$0xff]
        %v243 = vld [vmem:[%s1 + $0x8] sm:$0xff]
        %v244 = vld [vmem:[%s1 + $0x10] sm:$0xff]
        %v245 = vld [vmem:[%s1 + $0x18] sm:$0xff]
        %v246 = vld [vmem:[%s1 + $0x20] sm:$0xff]
        %v247 = vld [vmem:[%s1 + $0x28] sm:$0xff]
        %v248 = vld [vmem:[%s1 + $0x30] sm:$0xff]
        %v249 = vld [vmem:[%s1 + $0x38] sm:$0xff]
        %v250 = vld [vmem:[%s2] sm:$0x1]
        %v252 = vlaneseq
        %v253 = vshrl.u32 %v252, 7
        %v254 = vsub.s32 0, %v253
        %v255 = vrot.slane %v250, %v254
        %vm257 = vcmask 523264
        %v259 = vsel %vm257, %v226, 0
        %v262 = vsel %vm257, %v227, 0
        %v265 = vsel %vm257, %v228, 0
        %v268 = vsel %vm257, %v229, 0
        %v271 = vsel %vm257, %v230, 0
        %v274 = vsel %vm257, %v231, 0
        %v277 = vsel %vm257, %v232, 0
        %v280 = vsel %vm257, %v233, 0
        %v283 = vsel %vm257, %v234, 0
        %v286 = vsel %vm257, %v235, 0
        %v289 = vsel %vm257, %v236, 0
        %v292 = vsel %vm257, %v237, 0
        %v295 = vsel %vm257, %v238, 0
        %v298 = vsel %vm257, %v239, 0
        %v301 = vsel %vm257, %v240, 0
        %v304 = vsel %vm257, %v241, 0
        %306 = vmatprep.subr.mxu0 0.0
        %307 = vmatpush1.msra.mxu0 %v242
        %308 = vmatprep.subr.mxu0 0.0
        %309 = vmatpush1.msra.mxu0 %v243
        %310 = vmatprep.subr.mxu0 0.0
        %311 = vmatpush1.msra.mxu0 %v244
        %312 = vmatprep.subr.mxu0 0.0
        %313 = vmatpush1.msra.mxu0 %v245
        %314 = vmatprep.subr.mxu0 0.0
        %315 = vmatpush1.msra.mxu0 %v246
        %316 = vmatprep.subr.mxu0 0.0
        %317 = vmatpush1.msra.mxu0 %v247
        %318 = vmatprep.subr.mxu0 0.0
        %319 = vmatpush1.msra.mxu0 %v248
        %320 = vmatprep.subr.mxu0 0.0
        %321 = vmatpush1.msra.mxu0 %v249
        %322 = vmatprep.subr.mxu0 0.0
        %323 = vmatpush1.msra.mxu0 0.0
        %324 = vmatprep.subr.mxu0 0.0
        %325 = vmatpush1.msra.mxu0 0.0
        %326 = vmatprep.subr.mxu0 0.0
        %327 = vmatpush1.msra.mxu0 0.0
        %328 = vmatprep.subr.mxu0 0.0
        %329 = vmatpush1.msra.mxu0 0.0
        %330 = vmatprep.subr.mxu0 0.0
        %331 = vmatpush1.msra.mxu0 0.0
        %332 = vmatprep.subr.mxu0 0.0
        %333 = vmatpush1.msra.mxu0 0.0
        %334 = vmatprep.subr.mxu0 0.0
        %335 = vmatpush1.msra.mxu0 0.0
        %336 = vmatprep.subr.mxu0 0.0
        %337 = vmatpush1.msra.mxu0 0.0
        %338 = vmatprep.subr.mxu0 0.0
        %339 = vmatpush1.msra.mxu0 0.0
        %340 = vmatprep.subr.mxu0 0.0
        %341 = vmatpush1.msra.mxu0 0.0
        %342 = vmatprep.subr.mxu0 0.0
        %343 = vmatpush1.msra.mxu0 0.0
        %344 = vmatprep.subr.mxu0 0.0
        %345 = vmatpush1.msra.mxu0 0.0
        %346 = vmatprep.subr.mxu0 0.0
        %347 = vmatpush1.msra.mxu0 0.0
        %348 = vmatprep.subr.mxu0 0.0
        %349 = vmatpush1.msra.mxu0 0.0
        %350 = vmatprep.subr.mxu0 0.0
        %351 = vmatpush1.msra.mxu0 0.0
        %352 = vmatprep.subr.mxu0 0.0
        %353 = vmatpush1.msra.mxu0 0.0
        %354 = vmatprep.subr.mxu0 0.0
        %355 = vmatpush1.msra.mxu0 0.0
        %356 = vmatprep.subr.mxu0 0.0
        %357 = vmatpush1.msra.mxu0 0.0
        %358 = vmatprep.subr.mxu0 0.0
        %359 = vmatpush1.msra.mxu0 0.0
        %360 = vmatprep.subr.mxu0 0.0
        %361 = vmatpush1.msra.mxu0 0.0
        %362 = vmatprep.subr.mxu0 0.0
        %363 = vmatpush1.msra.mxu0 0.0
        %364 = vmatprep.subr.mxu0 0.0
        %365 = vmatpush1.msra.mxu0 0.0
        %366 = vmatprep.subr.mxu0 0.0
        %367 = vmatpush1.msra.mxu0 0.0
        %368 = vmatprep.subr.mxu0 0.0
        %369 = vmatpush1.msra.mxu0 0.0
        %370 = vmatprep.mubr.f32.mxu0 0.0
        %371 = vmatmul.mubr.f32.gmra.mrb[0].mxu0 %v259
        %v372 = vpop.f32.mrb[0].mxu0
        %v373 = vadd.f32 %v255, %v372
        %v374 = vpop.f32.mrb[0].mxu0
        %375 = vmatprep.mubr.f32.mxu0 0.0
        %376 = vmatmul.mubr.f32.gmra.mrb[0].mxu0 %v262
        %v377 = vpop.f32.mrb[0].mxu0
        %v378 = vadd.f32 %v255, %v377
        %v379 = vpop.f32.mrb[0].mxu0
        %380 = vmatprep.mubr.f32.mxu0 0.0
        %381 = vmatmul.mubr.f32.gmra.mrb[0].mxu0 %v265
        %v382 = vpop.f32.mrb[0].mxu0
        %v383 = vadd.f32 %v255, %v382
        %v384 = vpop.f32.mrb[0].mxu0
        %385 = vmatprep.mubr.f32.mxu0 0.0
        %386 = vmatmul.mubr.f32.gmra.mrb[0].mxu0 %v268
        %v387 = vpop.f32.mrb[0].mxu0
        %v388 = vadd.f32 %v255, %v387
        %v389 = vpop.f32.mrb[0].mxu0
        %390 = vmatprep.mubr.f32.mxu0 0.0
        %391 = vmatmul.mubr.f32.gmra.mrb[0].mxu0 %v271
        %v392 = vpop.f32.mrb[0].mxu0
        %v393 = vadd.f32 %v255, %v392
        %v394 = vpop.f32.mrb[0].mxu0
        %395 = vmatprep.mubr.f32.mxu0 0.0
        %396 = vmatmul.mubr.f32.gmra.mrb[0].mxu0 %v274
        %v397 = vpop.f32.mrb[0].mxu0
        %v398 = vadd.f32 %v255, %v397
        %v399 = vpop.f32.mrb[0].mxu0
        %400 = vmatprep.mubr.f32.mxu0 0.0
        %401 = vmatmul.mubr.f32.gmra.mrb[0].mxu0 %v277
        %v402 = vpop.f32.mrb[0].mxu0
        %v403 = vadd.f32 %v255, %v402
        %v404 = vpop.f32.mrb[0].mxu0
        %405 = vmatprep.mubr.f32.mxu0 0.0
        %406 = vmatmul.mubr.f32.gmra.mrb[0].mxu0 %v280
        %v407 = vpop.f32.mrb[0].mxu0
        %v408 = vadd.f32 %v255, %v407
        %v409 = vpop.f32.mrb[0].mxu0
        %410 = vmatprep.mubr.f32.mxu0 0.0
        %411 = vmatmul.mubr.f32.gmra.mrb[0].mxu0 %v283
        %v412 = vpop.f32.mrb[0].mxu0
        %v413 = vadd.f32 %v255, %v412
        %v414 = vpop.f32.mrb[0].mxu0
        %415 = vmatprep.mubr.f32.mxu0 0.0
        %416 = vmatmul.mubr.f32.gmra.mrb[0].mxu0 %v286
        %v417 = vpop.f32.mrb[0].mxu0
        %v418 = vadd.f32 %v255, %v417
        %v419 = vpop.f32.mrb[0].mxu0
        %420 = vmatprep.mubr.f32.mxu0 0.0
        %421 = vmatmul.mubr.f32.gmra.mrb[0].mxu0 %v289
        %v422 = vpop.f32.mrb[0].mxu0
        %v423 = vadd.f32 %v255, %v422
        %v424 = vpop.f32.mrb[0].mxu0
        %425 = vmatprep.mubr.f32.mxu0 0.0
        %426 = vmatmul.mubr.f32.gmra.mrb[0].mxu0 %v292
        %v427 = vpop.f32.mrb[0].mxu0
        %v428 = vadd.f32 %v255, %v427
        %v429 = vpop.f32.mrb[0].mxu0
        %430 = vmatprep.mubr.f32.mxu0 0.0
        %431 = vmatmul.mubr.f32.gmra.mrb[0].mxu0 %v295
        %v432 = vpop.f32.mrb[0].mxu0
        %v433 = vadd.f32 %v255, %v432
        %v434 = vpop.f32.mrb[0].mxu0
        %435 = vmatprep.mubr.f32.mxu0 0.0
        %436 = vmatmul.mubr.f32.gmra.mrb[0].mxu0 %v298
        %v437 = vpop.f32.mrb[0].mxu0
        %v438 = vadd.f32 %v255, %v437
        %v439 = vpop.f32.mrb[0].mxu0
        %440 = vmatprep.mubr.f32.mxu0 0.0
        %441 = vmatmul.mubr.f32.gmra.mrb[0].mxu0 %v301
        %v442 = vpop.f32.mrb[0].mxu0
        %v443 = vadd.f32 %v255, %v442
        %v444 = vpop.f32.mrb[0].mxu0
        %445 = vmatprep.mubr.f32.mxu0 0.0
        %446 = vmatmul.mubr.f32.gmra.mrb[0].mxu0 %v304
        %v447 = vpop.f32.mrb[0].mxu0
        %v448 = vadd.f32 %v255, %v447
        %v449 = vpop.f32.mrb[0].mxu0
        %450 = vdwg.mxu0
        %v451 = vld [vmem:[%s3] sm:$0xff]
        %v452 = vld [vmem:[%s3 + $0x8] sm:$0xff]
        %v453 = vld [vmem:[%s3 + $0x10] sm:$0xff]
        %v454 = vld [vmem:[%s3 + $0x18] sm:$0xff]
        %v455 = vld [vmem:[%s3 + $0x20] sm:$0xff]
        %v456 = vld [vmem:[%s3 + $0x28] sm:$0xff]
        %v457 = vld [vmem:[%s3 + $0x30] sm:$0xff]
        %v458 = vld [vmem:[%s3 + $0x38] sm:$0xff]
        %v459 = vld [vmem:[%s3 + $0x40] sm:$0xff]
        %v460 = vld [vmem:[%s3 + $0x48] sm:$0xff]
        %v461 = vld [vmem:[%s3 + $0x50] sm:$0xff]
        %v462 = vld [vmem:[%s3 + $0x58] sm:$0xff]
        %v463 = vld [vmem:[%s3 + $0x60] sm:$0xff]
        %v464 = vld [vmem:[%s3 + $0x68] sm:$0xff]
        %v465 = vld [vmem:[%s3 + $0x70] sm:$0xff]
        %v466 = vld [vmem:[%s3 + $0x78] sm:$0xff]
        %v467 = vld [vmem:[%s3 + $0x80] sm:$0xff]
        %v468 = vld [vmem:[%s3 + $0x88] sm:$0xff]
        %v469 = vld [vmem:[%s3 + $0x90] sm:$0xff]
        %v470 = vld [vmem:[%s3 + $0x98] sm:$0xff]
        %v471 = vld [vmem:[%s3 + $0xa0] sm:$0xff]
        %v472 = vld [vmem:[%s3 + $0xa8] sm:$0xff]
        %v473 = vld [vmem:[%s3 + $0xb0] sm:$0xff]
        %v474 = vld [vmem:[%s3 + $0xb8] sm:$0xff]
        %v475 = vld [vmem:[%s3 + $0xc0] sm:$0xff]
        %v476 = vld [vmem:[%s3 + $0xc8] sm:$0xff]
        %v477 = vld [vmem:[%s3 + $0xd0] sm:$0xff]
        %v478 = vld [vmem:[%s3 + $0xd8] sm:$0xff]
        %v479 = vld [vmem:[%s3 + $0xe0] sm:$0xff]
        %v480 = vld [vmem:[%s3 + $0xe8] sm:$0xff]
        %v481 = vld [vmem:[%s3 + $0xf0] sm:$0xff]
        %v482 = vld [vmem:[%s3 + $0xf8] sm:$0xff]
        %v483 = vld [vmem:[%s4] sm:$0x3]
        %v485 = vlaneseq
        %v486 = vshrl.u32 %v485, 7
        %v487 = vsub.s32 0, %v486
        %v488 = vrot.slane %v483, %v487
        %v489 = vlaneseq
        %v490 = vshrl.u32 %v489, 7
        %v491 = vsub.s32 1, %v490
        %v492 = vrot.slane %v483, %v491
        %495 = vmatprep.subr.mxu0 %v452
        %496 = vmatpush1.msra.mxu0 %v451
        %497 = vmatprep.subr.mxu0 %v454
        %498 = vmatpush1.msra.mxu0 %v453
        %499 = vmatprep.subr.mxu0 %v456
        %500 = vmatpush1.msra.mxu0 %v455
        %501 = vmatprep.subr.mxu0 %v458
        %502 = vmatpush1.msra.mxu0 %v457
        %503 = vmatprep.subr.mxu0 %v460
        %504 = vmatpush1.msra.mxu0 %v459
        %505 = vmatprep.subr.mxu0 %v462
        %506 = vmatpush1.msra.mxu0 %v461
        %507 = vmatprep.subr.mxu0 %v464
        %508 = vmatpush1.msra.mxu0 %v463
        %509 = vmatprep.subr.mxu0 %v466
        %510 = vmatpush1.msra.mxu0 %v465
        %511 = vmatprep.subr.mxu0 %v468
        %512 = vmatpush1.msra.mxu0 %v467
        %513 = vmatprep.subr.mxu0 %v470
        %514 = vmatpush1.msra.mxu0 %v469
        %515 = vmatprep.subr.mxu0 %v472
        %516 = vmatpush1.msra.mxu0 %v471
        %517 = vmatprep.subr.mxu0 %v474
        %518 = vmatpush1.msra.mxu0 %v473
        %519 = vmatprep.subr.mxu0 %v476
        %520 = vmatpush1.msra.mxu0 %v475
        %521 = vmatprep.subr.mxu0 %v478
        %522 = vmatpush1.msra.mxu0 %v477
        %523 = vmatprep.subr.mxu0 %v480
        %524 = vmatpush1.msra.mxu0 %v479
        %525 = vmatprep.subr.mxu0 %v482
        %526 = vmatpush1.msra.mxu0 %v481
        %527 = vmatprep.subr.mxu0 0.0
        %528 = vmatpush1.msra.mxu0 0.0
        %529 = vmatprep.subr.mxu0 0.0
        %530 = vmatpush1.msra.mxu0 0.0
        %531 = vmatprep.subr.mxu0 0.0
        %532 = vmatpush1.msra.mxu0 0.0
        %533 = vmatprep.subr.mxu0 0.0
        %534 = vmatpush1.msra.mxu0 0.0
        %535 = vmatprep.subr.mxu0 0.0
        %536 = vmatpush1.msra.mxu0 0.0
        %537 = vmatprep.subr.mxu0 0.0
        %538 = vmatpush1.msra.mxu0 0.0
        %539 = vmatprep.subr.mxu0 0.0
        %540 = vmatpush1.msra.mxu0 0.0
        %541 = vmatprep.subr.mxu0 0.0
        %542 = vmatpush1.msra.mxu0 0.0
        %543 = vmatprep.subr.mxu0 0.0
        %544 = vmatpush1.msra.mxu0 0.0
        %545 = vmatprep.subr.mxu0 0.0
        %546 = vmatpush1.msra.mxu0 0.0
        %547 = vmatprep.subr.mxu0 0.0
        %548 = vmatpush1.msra.mxu0 0.0
        %549 = vmatprep.subr.mxu0 0.0
        %550 = vmatpush1.msra.mxu0 0.0
        %551 = vmatprep.subr.mxu0 0.0
        %552 = vmatpush1.msra.mxu0 0.0
        %553 = vmatprep.subr.mxu0 0.0
        %554 = vmatpush1.msra.mxu0 0.0
        %555 = vmatprep.subr.mxu0 0.0
        %556 = vmatpush1.msra.mxu0 0.0
        %557 = vmatprep.subr.mxu0 0.0
        %558 = vmatpush1.msra.mxu0 0.0
        %559 = vmatprep.mubr.f32.mxu0 0.0
        %560 = vmatmul.mubr.f32.gmra.mrb[0].mxu0 %v373
        %v561 = vpop.f32.mrb[0].mxu0
        %v562 = vadd.f32 %v488, %v561
        %v563 = vpop.f32.mrb[0].mxu0
        %v564 = vadd.f32 %v492, %v563
        %565 = vmatprep.mubr.f32.mxu0 0.0
        %566 = vmatmul.mubr.f32.gmra.mrb[0].mxu0 %v378
        %v567 = vpop.f32.mrb[0].mxu0
        %v568 = vadd.f32 %v488, %v567
        %v569 = vpop.f32.mrb[0].mxu0
        %v570 = vadd.f32 %v492, %v569
        %571 = vmatprep.mubr.f32.mxu0 0.0
        %572 = vmatmul.mubr.f32.gmra.mrb[0].mxu0 %v383
        %v573 = vpop.f32.mrb[0].mxu0
        %v574 = vadd.f32 %v488, %v573
        %v575 = vpop.f32.mrb[0].mxu0
        %v576 = vadd.f32 %v492, %v575
        %577 = vmatprep.mubr.f32.mxu0 0.0
        %578 = vmatmul.mubr.f32.gmra.mrb[0].mxu0 %v388
        %v579 = vpop.f32.mrb[0].mxu0
        %v580 = vadd.f32 %v488, %v579
        %v581 = vpop.f32.mrb[0].mxu0
        %v582 = vadd.f32 %v492, %v581
        %583 = vmatprep.mubr.f32.mxu0 0.0
        %584 = vmatmul.mubr.f32.gmra.mrb[0].mxu0 %v393
        %v585 = vpop.f32.mrb[0].mxu0
        %v586 = vadd.f32 %v488, %v585
        %v587 = vpop.f32.mrb[0].mxu0
        %v588 = vadd.f32 %v492, %v587
        %589 = vmatprep.mubr.f32.mxu0 0.0
        %590 = vmatmul.mubr.f32.gmra.mrb[0].mxu0 %v398
        %v591 = vpop.f32.mrb[0].mxu0
        %v592 = vadd.f32 %v488, %v591
        %v593 = vpop.f32.mrb[0].mxu0
        %v594 = vadd.f32 %v492, %v593
        %595 = vmatprep.mubr.f32.mxu0 0.0
        %596 = vmatmul.mubr.f32.gmra.mrb[0].mxu0 %v403
        %v597 = vpop.f32.mrb[0].mxu0
        %v598 = vadd.f32 %v488, %v597
        %v599 = vpop.f32.mrb[0].mxu0
        %v600 = vadd.f32 %v492, %v599
        %601 = vmatprep.mubr.f32.mxu0 0.0
        %602 = vmatmul.mubr.f32.gmra.mrb[0].mxu0 %v408
        %v603 = vpop.f32.mrb[0].mxu0
        %v604 = vadd.f32 %v488, %v603
        %v605 = vpop.f32.mrb[0].mxu0
        %v606 = vadd.f32 %v492, %v605
        %607 = vmatprep.mubr.f32.mxu0 0.0
        %608 = vmatmul.mubr.f32.gmra.mrb[0].mxu0 %v413
        %v609 = vpop.f32.mrb[0].mxu0
        %v610 = vadd.f32 %v488, %v609
        %v611 = vpop.f32.mrb[0].mxu0
        %v612 = vadd.f32 %v492, %v611
        %613 = vmatprep.mubr.f32.mxu0 0.0
        %614 = vmatmul.mubr.f32.gmra.mrb[0].mxu0 %v418
        %v615 = vpop.f32.mrb[0].mxu0
        %v616 = vadd.f32 %v488, %v615
        %v617 = vpop.f32.mrb[0].mxu0
        %v618 = vadd.f32 %v492, %v617
        %619 = vmatprep.mubr.f32.mxu0 0.0
        %620 = vmatmul.mubr.f32.gmra.mrb[0].mxu0 %v423
        %v621 = vpop.f32.mrb[0].mxu0
        %v622 = vadd.f32 %v488, %v621
        %v623 = vpop.f32.mrb[0].mxu0
        %v624 = vadd.f32 %v492, %v623
        %625 = vmatprep.mubr.f32.mxu0 0.0
        %626 = vmatmul.mubr.f32.gmra.mrb[0].mxu0 %v428
        %v627 = vpop.f32.mrb[0].mxu0
        %v628 = vadd.f32 %v488, %v627
        %v629 = vpop.f32.mrb[0].mxu0
        %v630 = vadd.f32 %v492, %v629
        %631 = vmatprep.mubr.f32.mxu0 0.0
        %632 = vmatmul.mubr.f32.gmra.mrb[0].mxu0 %v433
        %v633 = vpop.f32.mrb[0].mxu0
        %v634 = vadd.f32 %v488, %v633
        %v635 = vpop.f32.mrb[0].mxu0
        %v636 = vadd.f32 %v492, %v635
        %637 = vmatprep.mubr.f32.mxu0 0.0
        %638 = vmatmul.mubr.f32.gmra.mrb[0].mxu0 %v438
        %v639 = vpop.f32.mrb[0].mxu0
        %v640 = vadd.f32 %v488, %v639
        %v641 = vpop.f32.mrb[0].mxu0
        %v642 = vadd.f32 %v492, %v641
        %643 = vmatprep.mubr.f32.mxu0 0.0
        %644 = vmatmul.mubr.f32.gmra.mrb[0].mxu0 %v443
        %v645 = vpop.f32.mrb[0].mxu0
        %v646 = vadd.f32 %v488, %v645
        %v647 = vpop.f32.mrb[0].mxu0
        %v648 = vadd.f32 %v492, %v647
        %649 = vmatprep.mubr.f32.mxu0 0.0
        %650 = vmatmul.mubr.f32.gmra.mrb[0].mxu0 %v448
        %v651 = vpop.f32.mrb[0].mxu0
        %v652 = vadd.f32 %v488, %v651
        %v653 = vpop.f32.mrb[0].mxu0
        %v654 = vadd.f32 %v492, %v653
        %655 = vdwg.mxu0
        %656 = vst [vmem:[%s218] sm:$0xff] %v562
        %657 = vst [vmem:[%s218 + $0x8] sm:$0xff] %v564
        %658 = vst [vmem:[%s218 + $0x10] sm:$0xff] %v568
        %659 = vst [vmem:[%s218 + $0x18] sm:$0xff] %v570
        %660 = vst [vmem:[%s218 + $0x20] sm:$0xff] %v574
        %661 = vst [vmem:[%s218 + $0x28] sm:$0xff] %v576
        %662 = vst [vmem:[%s218 + $0x30] sm:$0xff] %v580
        %663 = vst [vmem:[%s218 + $0x38] sm:$0xff] %v582
        %664 = vst [vmem:[%s218 + $0x40] sm:$0xff] %v586
        %665 = vst [vmem:[%s218 + $0x48] sm:$0xff] %v588
        %666 = vst [vmem:[%s218 + $0x50] sm:$0xff] %v592
        %667 = vst [vmem:[%s218 + $0x58] sm:$0xff] %v594
        %668 = vst [vmem:[%s218 + $0x60] sm:$0xff] %v598
        %669 = vst [vmem:[%s218 + $0x68] sm:$0xff] %v600
        %670 = vst [vmem:[%s218 + $0x70] sm:$0xff] %v604
        %671 = vst [vmem:[%s218 + $0x78] sm:$0xff] %v606
        %672 = vst [vmem:[%s218 + $0x80] sm:$0xff] %v610
        %673 = vst [vmem:[%s218 + $0x88] sm:$0xff] %v612
        %674 = vst [vmem:[%s218 + $0x90] sm:$0xff] %v616
        %675 = vst [vmem:[%s218 + $0x98] sm:$0xff] %v618
        %676 = vst [vmem:[%s218 + $0xa0] sm:$0xff] %v622
        %677 = vst [vmem:[%s218 + $0xa8] sm:$0xff] %v624
        %678 = vst [vmem:[%s218 + $0xb0] sm:$0xff] %v628
        %679 = vst [vmem:[%s218 + $0xb8] sm:$0xff] %v630
        %680 = vst [vmem:[%s218 + $0xc0] sm:$0xff] %v634
        %681 = vst [vmem:[%s218 + $0xc8] sm:$0xff] %v636
        %682 = vst [vmem:[%s218 + $0xd0] sm:$0xff] %v640
        %683 = vst [vmem:[%s218 + $0xd8] sm:$0xff] %v642
        %684 = vst [vmem:[%s218 + $0xe0] sm:$0xff] %v646
        %685 = vst [vmem:[%s218 + $0xe8] sm:$0xff] %v648
        %686 = vst [vmem:[%s218 + $0xf0] sm:$0xff] %v652
        %687 = vst [vmem:[%s218 + $0xf8] sm:$0xff] %v654
        %s688 = sand.u32 %s137, 1
        %s689 = scalar_lea.sflag [#allocation3], %s688
        %s690 = sand.u32 %s137, 1
        %s691 = smul.addr %s690, 256
        %s692 = scalar_lea.vmem [#allocation2], %s691
        // Predicated region
        $region41: #{tpu_custom_call.1} parent=39 // pred_check
          %p693 = pneg %p147
        $region42: #{tpu_custom_call.1} parent=39 // pred_check_branch
          %695 = sbr.rel (%p693) target = $region44
        $region43: #{tpu_custom_call.1} parent=39 // pred_region
          %s696 = smul.u32 16, %s19
          %s698 = ssub.s32 4096, 4096
          %699 = vsyncadd %s689, %s698
          %s700 = smul.addr %s696, 2
          %s701 = smul.addr %s700, 128
          %s702 = scalar_lea.hbm %s5, %s701
          %s703 = sshll.u32 %s692, 4
          %s704 = int_to_ptr.vmem [resolvable:$true] %s703
          %709 = dma.vmem_to_hbm [thread:$0]  %s704, 4096, %s702, %s689, 256, 256, 16
        $region44: #{tpu_custom_call.1} parent=39 // pred_fallthru
          _
      $region40: #{tpu_custom_call.1} parent=5 // pred_fallthru
        _
      %p710 = scmp.le.s32.totalorder 2, %s14
      // Predicated region
      $region45: #{tpu_custom_call.1} parent=5 // pred_check
        %p711 = pneg %p710
      $region46: #{tpu_custom_call.1} parent=5 // pred_check_branch
        %713 = sbr.rel (%p711) target = $region48
      $region47: #{tpu_custom_call.1} parent=5 // pred_region
        %s714 = ssub.s32 %s14, 2
        // Predicated region
        $region49: #{tpu_custom_call.1} parent=47 // pred_check
          %p715 = pneg %p153
        $region50: #{tpu_custom_call.1} parent=47 // pred_check_branch
          %717 = sbr.rel (%p715) target = $region52
        $region51: #{tpu_custom_call.1} parent=47 // pred_region
          %s718 = sand.u32 %s138, 1
          %s719 = scalar_lea.sflag [#allocation3], %s718
          %s720 = sand.u32 %s138, 1
          %s721 = smul.addr %s720, 256
          %s722 = scalar_lea.vmem [#allocation2], %s721
          %723 = dma.done %s719, 4096
        $region52: #{tpu_custom_call.1} parent=47 // pred_fallthru
          _
      $region48: #{tpu_custom_call.1} parent=5 // pred_fallthru
        _
    $region6: #{tpu_custom_call.1} parent=1 // loop_footer
      %s18 = sadd.s32 1, %s14
    $region7: #{tpu_custom_call.1} parent=1 // loop_footer_branch
      %13 = sbr.rel target = $region3
    $region8: #{tpu_custom_call.1} parent=1 // loop_exit
      _
    %724 = vsyncpa [#allocation3], 1
    %s725 = scalar_lea.sflag [#allocation3], 1
    %726 = vsyncpa %s725, 1

</llo_original>
